<compile_context>
chip_gen: v7x
topology: tpu7x:2x2x1
jax: 0.10.0
libtpu: 0.0.40
codegen_flags: <defaults>
</compile_context>

<pallas_src>
import jax
import jax.numpy as jnp
from jax.experimental import pallas as pl
from jax.experimental.pallas import tpu as pltpu

LANE = 128


def _round_up(n, m):
    return ((n + m - 1) // m) * m


def conv1x1_kernel(x_ref, w_ref, b_ref, o_ref):
    # x_ref: (P, C_in) bf16, w_ref: (C_in, C_out_pad) bf16,
    # b_ref: (1, C_out_pad) f32, o_ref: (P, C_out_pad) f32
    acc = jnp.dot(x_ref[...], w_ref[...], preferred_element_type=jnp.float32)
    o_ref[...] = acc + b_ref[...]


def prepare_conv1x1_params(weight_oihw, bias, compute_dtype=jnp.bfloat16):
    """One-time weight preparation (init-time, NOT in the per-call path).

    weight_oihw: (C_out, C_in, 1, 1) PyTorch Conv2d layout, f32
    bias:        (C_out,) f32
    returns:     w2d (C_in, C_out_pad) compute_dtype, b2d (1, C_out_pad) f32
    """
    C_out, C_in = weight_oihw.shape[0], weight_oihw.shape[1]
    C_out_pad = _round_up(C_out, LANE)
    w2d = weight_oihw.reshape(C_out, C_in).T.astype(compute_dtype)  # (C_in, C_out)
    w2d = jnp.pad(w2d, ((0, 0), (0, C_out_pad - C_out)))
    b2d = bias.astype(jnp.float32).reshape(1, C_out)
    b2d = jnp.pad(b2d, ((0, 0), (0, C_out_pad - C_out)))
    return w2d, b2d


def conv1x1(x_nchw, w_prepared, b_prepared, C_out):
    """1x1 conv, stride 1, as a single-step Pallas matmul kernel.

    x_nchw:     (N, C_in, H, W) f32
    w_prepared: (C_in, C_out_pad) bf16   (from prepare_conv1x1_params)
    b_prepared: (1, C_out_pad) f32
    returns:    (N, C_out, H, W) f32
    """
    N, C_in, H, W = x_nchw.shape
    C_out_pad = w_prepared.shape[1]
    P = N * H * W

    if H == 1 and W == 1:
        # Pure layout no-op: avoid emitting transpose/copy ops.
        x2d = x_nchw.reshape(N, C_in)
    else:
        x2d = jnp.transpose(x_nchw, (0, 2, 3, 1)).reshape(P, C_in)
    x2d = x2d.astype(w_prepared.dtype)

    bytes_accessed = (
        x2d.size * x2d.dtype.itemsize
        + w_prepared.size * w_prepared.dtype.itemsize
        + b_prepared.size * 4
        + P * C_out_pad * 4
    )
    cost = pl.CostEstimate(
        flops=2 * P * C_in * C_out_pad,
        transcendentals=0,
        bytes_accessed=bytes_accessed,
    )

    out2d = pl.pallas_call(
        conv1x1_kernel,
        out_shape=jax.ShapeDtypeStruct((P, C_out_pad), jnp.float32),
        grid_spec=pltpu.PrefetchScalarGridSpec(
            num_scalar_prefetch=0,
            grid=(1,),
            in_specs=[
                pl.BlockSpec((P, C_in), lambda i: (0, 0)),
                pl.BlockSpec((C_in, C_out_pad), lambda i: (0, 0)),
                pl.BlockSpec((1, C_out_pad), lambda i: (0, 0)),
            ],
            out_specs=pl.BlockSpec((P, C_out_pad), lambda i: (0, 0)),
        ),
        compiler_params=pltpu.CompilerParams(
            dimension_semantics=("arbitrary",),
        ),
        cost_estimate=cost,
    )(x2d, w_prepared, b_prepared)

    out2d = out2d[:, :C_out]
    if H == 1 and W == 1:
        return out2d.reshape(N, C_out, H, W)
    return jnp.transpose(out2d.reshape(N, H, W, C_out), (0, 3, 1, 2))


if __name__ == "__main__":
    key = jax.random.PRNGKey(0)
    k_x, k_w, k_b = jax.random.split(key, 3)

    N, C_in, H, W = 1, 86, 1, 1
    C_out = 2064

    x = jax.random.normal(k_x, (N, C_in, H, W), dtype=jnp.float32)
    # Deterministic "Conv2d"-style init (synthetic, not a checkpoint load).
    fan_in = C_in * 1 * 1
    bound = 1.0 / (fan_in ** 0.5)
    weight = jax.random.uniform(k_w, (C_out, C_in, 1, 1),
                                minval=-bound, maxval=bound, dtype=jnp.float32)
    bias = jax.random.uniform(k_b, (C_out,),
                              minval=-bound, maxval=bound, dtype=jnp.float32)

    # One-time weight prep (init-time): transpose + bf16 cast + lane padding.
    w_prep, b_prep = prepare_conv1x1_params(weight, bias)
    w_prep, b_prep = jax.block_until_ready((w_prep, b_prep))

    out = conv1x1(x, w_prep, b_prep, C_out)
    out = jax.block_until_ready(out)

    # Sanity check against plain-JAX f32 reference (tolerance relaxed for
    # bf16 weights/activations with f32 accumulation).
    ref = jnp.einsum("nchw,oc->nohw", x, weight.reshape(C_out, C_in)) \
        + bias.reshape(1, C_out, 1, 1)
    assert out.shape == (N, C_out, H, W), out.shape
    assert jnp.allclose(out, ref, atol=5e-2, rtol=5e-2), \
        float(jnp.max(jnp.abs(out - ref)))

    print("KERNEL_OK")
</pallas_src>

<mosaic_0001>
module attributes {stable_mosaic.version = 11 : i64} {
  func.func @conv1x1_kernel(%arg0: i32, %arg1: memref<1x86xbf16, #tpu.memory_space<vmem>>, %arg2: memref<86x2176xbf16, #tpu.memory_space<vmem>>, %arg3: memref<1x2176xf32, #tpu.memory_space<vmem>>, %arg4: memref<1x2176xf32, #tpu.memory_space<vmem>>) attributes {dimension_semantics = [#tpu.dimension_semantics<arbitrary>], iteration_bounds = array<i64: 1>, scalar_prefetch = 0 : i64, scratch_operands = 0 : i64, tpu.core_type = #tpu.core_type<tc>, window_params = [{pipeline_mode = #tpu.pipeline_mode<synchronous>, transform_indices = @transform_0, window_bounds = array<i64: 1, 86>}, {pipeline_mode = #tpu.pipeline_mode<synchronous>, transform_indices = @transform_1, window_bounds = array<i64: 86, 2176>}, {pipeline_mode = #tpu.pipeline_mode<synchronous>, transform_indices = @transform_2, window_bounds = array<i64: 1, 2176>}, {pipeline_mode = #tpu.pipeline_mode<synchronous>, transform_indices = @transform_3, window_bounds = array<i64: 1, 2176>}]} {
    %c0 = arith.constant 0 : index
    %c0_0 = arith.constant 0 : index
    %0 = vector.load %arg1[%c0, %c0_0] : memref<1x86xbf16, #tpu.memory_space<vmem>>, vector<1x86xbf16>
    %c0_1 = arith.constant 0 : index
    %c0_2 = arith.constant 0 : index
    %1 = vector.load %arg2[%c0_1, %c0_2] : memref<86x2176xbf16, #tpu.memory_space<vmem>>, vector<86x2176xbf16>
    %cst = arith.constant dense<0.000000e+00> : vector<1x2176xf32>
    %2 = tpu.matmul %0, %1, %cst {dimension_numbers = #tpu.dot_dimension_numbers<[1], [0], [0], [1], [0, 0, 1, 1], [], []>} : vector<1x86xbf16>, vector<86x2176xbf16>, vector<1x2176xf32> -> vector<1x2176xf32>
    %c0_3 = arith.constant 0 : index
    %c0_4 = arith.constant 0 : index
    %3 = vector.load %arg3[%c0_3, %c0_4] : memref<1x2176xf32, #tpu.memory_space<vmem>>, vector<1x2176xf32>
    %4 = arith.addf %2, %3 : vector<1x2176xf32>
    %c0_5 = arith.constant 0 : index
    %c0_6 = arith.constant 0 : index
    %5 = vector.load %arg4[%c0_5, %c0_6] : memref<1x2176xf32, #tpu.memory_space<vmem>>, vector<1x2176xf32>
    tpu.vector_store %arg4[%c0_5, %c0_6], %4 {strides = array<i32>} : memref<1x2176xf32, #tpu.memory_space<vmem>>, vector<1x2176xf32>,
    return
  }
  func.func @transform_0(%arg0: i32) -> (i32, i32) {
    %c0_i32 = arith.constant 0 : i32
    %c0_i32_0 = arith.constant 0 : i32
    %c0_i32_1 = arith.constant 0 : i32
    return %c0_i32, %c0_i32_0 : i32, i32
  }
  func.func @transform_1(%arg0: i32) -> (i32, i32) {
    %c0_i32 = arith.constant 0 : i32
    %c0_i32_0 = arith.constant 0 : i32
    %c0_i32_1 = arith.constant 0 : i32
    return %c0_i32, %c0_i32_0 : i32, i32
  }
  func.func @transform_2(%arg0: i32) -> (i32, i32) {
    %c0_i32 = arith.constant 0 : i32
    %c0_i32_0 = arith.constant 0 : i32
    %c0_i32_1 = arith.constant 0 : i32
    return %c0_i32, %c0_i32_0 : i32, i32
  }
  func.func @transform_3(%arg0: i32) -> (i32, i32) {
    %c0_i32 = arith.constant 0 : i32
    %c0_i32_0 = arith.constant 0 : i32
    %c0_i32_1 = arith.constant 0 : i32
    return %c0_i32, %c0_i32_0 : i32, i32
  }
}

</mosaic_0001>

<llo_original>
// kernel: tpu_custom_call.1
$region0: #{tpu_custom_call.1}
  #allocation0 [shape = 'u32[]', space=smem, size = 0x4, offset = 0x4, fixed_abs, tag = 'smem constant byte address 0x4 - core index']
  #allocation1 [shape = 'u32[144,128]{1,0:T(1,128)}', space=vmem, size = 0x12000, scoped, tag = 'internal scratch']
  %s0 = inlined_call_operand.hbm [shape: bf16[1,86], index: 0, kind: input, shape index: {}]
  %s1 = inlined_call_operand.hbm [shape: bf16[86,2176], index: 1, kind: input, shape index: {}]
  %s2 = inlined_call_operand.hbm [shape: f32[1,2176], index: 2, kind: input, shape index: {}]
  %s3 = inlined_call_operand.hbm [shape: f32[1,2176], index: 3, kind: output, shape index: {}]
  %s4 = sld [smem:[#allocation0]]
  $region34: #{tpu_custom_call.1} parent=0
    _
  %s6 = ssub.s32 1, %s4
  %s7 = scalar_select 0, %s6, %s4
  $region1: #{tpu_custom_call.1} parent=0
    #allocation2 [shape = 'u8[512]{0}', space=vmem, size = 0x400, scoped, tag = 'input window, operand 0, single buffered']
    #allocation3 [shape = 's32[1]{0}', space=sflag, size = 0x4, scoped, tag = 'scoped memory for tpu_custom_call.1']
    #allocation4 [shape = 's32[1]{0}', space=sflag, size = 0x4, scoped, tag = 'scoped memory for tpu_custom_call.1']
    #allocation5 [shape = 'u8[382976]{0}', space=vmem, size = 0x5d800, scoped, tag = 'input window, operand 1, single buffered']
    #allocation6 [shape = 's32[1]{0}', space=sflag, size = 0x4, scoped, tag = 'scoped memory for tpu_custom_call.1']
    #allocation7 [shape = 'u8[8704]{0}', space=vmem, size = 0x2400, scoped, tag = 'input window, operand 2, single buffered']
    #allocation8 [shape = 'u8[8704]{0}', space=vmem, size = 0x2400, scoped, tag = 'output window, operand 0, single buffered']
    %8 = vsyncpa [#allocation3], 0
    %9 = vsyncpa [#allocation6], 0
    %10 = vsyncpa [#allocation4], 0
    // Predicated region
    $region2: #{tpu_custom_call.1} parent=1 // pred_check
      _
    $region3: #{tpu_custom_call.1} parent=1 // pred_check_branch
      %12 = sbr.rel (0) target = $region5
    $region4: #{tpu_custom_call.1} parent=1 // pred_region
      %s14 = ssub.s32 16, 16
      %15 = vsyncadd [#allocation3], %s14
      %s17 = sshll.u32 [#allocation2], 4
      %s18 = int_to_ptr.vmem [resolvable:$true] %s17
      %20 = dma.hbm_to_vmem [thread:$0]  %s0, 16, %s18, [#allocation3]
    $region5: #{tpu_custom_call.1} parent=1 // pred_fallthru
      _
    // Predicated region
    $region6: #{tpu_custom_call.1} parent=1 // pred_check
      _
    $region7: #{tpu_custom_call.1} parent=1 // pred_check_branch
      %22 = sbr.rel (0) target = $region9
    $region8: #{tpu_custom_call.1} parent=1 // pred_region
      %s24 = ssub.s32 11968, 11968
      %25 = vsyncadd [#allocation6], %s24
      %s26 = sshll.u32 [#allocation5], 4
      %s27 = int_to_ptr.vmem [resolvable:$true] %s26
      %32 = dma.hbm_to_vmem [thread:$0]  %s1, 11968, %s27, [#allocation6], 1088, 1088, 68
    $region9: #{tpu_custom_call.1} parent=1 // pred_fallthru
      _
    // Predicated region
    $region10: #{tpu_custom_call.1} parent=1 // pred_check
      _
    $region11: #{tpu_custom_call.1} parent=1 // pred_check_branch
      %34 = sbr.rel (0) target = $region13
    $region12: #{tpu_custom_call.1} parent=1 // pred_region
      %s36 = ssub.s32 272, 272
      %37 = vsyncadd [#allocation6], %s36
      %s39 = sshll.u32 [#allocation7], 4
      %s40 = int_to_ptr.vmem [resolvable:$true] %s39
      %42 = dma.hbm_to_vmem [thread:$0]  %s2, 272, %s40, [#allocation6]
    $region13: #{tpu_custom_call.1} parent=1 // pred_fallthru
      _
    // Predicated region
    $region14: #{tpu_custom_call.1} parent=1 // pred_check
      _
    $region15: #{tpu_custom_call.1} parent=1 // pred_check_branch
      %44 = sbr.rel (0) target = $region17
    $region16: #{tpu_custom_call.1} parent=1 // pred_region
      %45 = dma.done [#allocation3], 16
    $region17: #{tpu_custom_call.1} parent=1 // pred_fallthru
      _
    // Predicated region
    $region18: #{tpu_custom_call.1} parent=1 // pred_check
      _
    $region19: #{tpu_custom_call.1} parent=1 // pred_check_branch
      %47 = sbr.rel (0) target = $region21
    $region20: #{tpu_custom_call.1} parent=1 // pred_region
      %48 = dma.done [#allocation6], 11968
    $region21: #{tpu_custom_call.1} parent=1 // pred_fallthru
      _
    // Predicated region
    $region22: #{tpu_custom_call.1} parent=1 // pred_check
      _
    $region23: #{tpu_custom_call.1} parent=1 // pred_check_branch
      %50 = sbr.rel (0) target = $region25
    $region24: #{tpu_custom_call.1} parent=1 // pred_region
      %51 = dma.done [#allocation6], 272
    $region25: #{tpu_custom_call.1} parent=1 // pred_fallthru
      _
    %v53 = vld [vmem:[#allocation2] sm:$0x1]
    %v54 = vld [vmem:[#allocation5] sm:$0xff]
    %v55 = vld [vmem:[#allocation5 + $0x8] sm:$0xff]
    %v56 = vld [vmem:[#allocation5 + $0x10] sm:$0xff]
    %v57 = vld [vmem:[#allocation5 + $0x18] sm:$0xff]
    %v58 = vld [vmem:[#allocation5 + $0x20] sm:$0xff]
    %v59 = vld [vmem:[#allocation5 + $0x28] sm:$0xff]
    %v60 = vld [vmem:[#allocation5 + $0x30] sm:$0xff]
    %v61 = vld [vmem:[#allocation5 + $0x38] sm:$0xff]
    %v62 = vld [vmem:[#allocation5 + $0x40] sm:$0xf]
    %v63 = vld [vmem:[#allocation5 + $0x44] sm:$0xff]
    %v64 = vld [vmem:[#allocation5 + $0x4c] sm:$0xff]
    %v65 = vld [vmem:[#allocation5 + $0x54] sm:$0xff]
    %v66 = vld [vmem:[#allocation5 + $0x5c] sm:$0xff]
    %v67 = vld [vmem:[#allocation5 + $0x64] sm:$0xff]
    %v68 = vld [vmem:[#allocation5 + $0x6c] sm:$0xff]
    %v69 = vld [vmem:[#allocation5 + $0x74] sm:$0xff]
    %v70 = vld [vmem:[#allocation5 + $0x7c] sm:$0xff]
    %v71 = vld [vmem:[#allocation5 + $0x84] sm:$0xf]
    %v72 = vld [vmem:[#allocation5 + $0x88] sm:$0xff]
    %v73 = vld [vmem:[#allocation5 + $0x90] sm:$0xff]
    %v74 = vld [vmem:[#allocation5 + $0x98] sm:$0xff]
    %v75 = vld [vmem:[#allocation5 + $0xa0] sm:$0xff]
    %v76 = vld [vmem:[#allocation5 + $0xa8] sm:$0xff]
    %v77 = vld [vmem:[#allocation5 + $0xb0] sm:$0xff]
    %v78 = vld [vmem:[#allocation5 + $0xb8] sm:$0xff]
    %v79 = vld [vmem:[#allocation5 + $0xc0] sm:$0xff]
    %v80 = vld [vmem:[#allocation5 + $0xc8] sm:$0xf]
    %v81 = vld [vmem:[#allocation5 + $0xcc] sm:$0xff]
    %v82 = vld [vmem:[#allocation5 + $0xd4] sm:$0xff]
    %v83 = vld [vmem:[#allocation5 + $0xdc] sm:$0xff]
    %v84 = vld [vmem:[#allocation5 + $0xe4] sm:$0xff]
    %v85 = vld [vmem:[#allocation5 + $0xec] sm:$0xff]
    %v86 = vld [vmem:[#allocation5 + $0xf4] sm:$0xff]
    %v87 = vld [vmem:[#allocation5 + $0xfc] sm:$0xff]
    %v88 = vld [vmem:[#allocation5 + $0x104] sm:$0xff]
    %v89 = vld [vmem:[#allocation5 + $0x10c] sm:$0xf]
    %v90 = vld [vmem:[#allocation5 + $0x110] sm:$0xff]
    %v91 = vld [vmem:[#allocation5 + $0x118] sm:$0xff]
    %v92 = vld [vmem:[#allocation5 + $0x120] sm:$0xff]
    %v93 = vld [vmem:[#allocation5 + $0x128] sm:$0xff]
    %v94 = vld [vmem:[#allocation5 + $0x130] sm:$0xff]
    %v95 = vld [vmem:[#allocation5 + $0x138] sm:$0xff]
    %v96 = vld [vmem:[#allocation5 + $0x140] sm:$0xff]
    %v97 = vld [vmem:[#allocation5 + $0x148] sm:$0xff]
    %v98 = vld [vmem:[#allocation5 + $0x150] sm:$0xf]
    %v99 = vld [vmem:[#allocation5 + $0x154] sm:$0xff]
    %v100 = vld [vmem:[#allocation5 + $0x15c] sm:$0xff]
    %v101 = vld [vmem:[#allocation5 + $0x164] sm:$0xff]
    %v102 = vld [vmem:[#allocation5 + $0x16c] sm:$0xff]
    %v103 = vld [vmem:[#allocation5 + $0x174] sm:$0xff]
    %v104 = vld [vmem:[#allocation5 + $0x17c] sm:$0xff]
    %v105 = vld [vmem:[#allocation5 + $0x184] sm:$0xff]
    %v106 = vld [vmem:[#allocation5 + $0x18c] sm:$0xff]
    %v107 = vld [vmem:[#allocation5 + $0x194] sm:$0xf]
    %v108 = vld [vmem:[#allocation5 + $0x198] sm:$0xff]
    %v109 = vld [vmem:[#allocation5 + $0x1a0] sm:$0xff]
    %v110 = vld [vmem:[#allocation5 + $0x1a8] sm:$0xff]
    %v111 = vld [vmem:[#allocation5 + $0x1b0] sm:$0xff]
    %v112 = vld [vmem:[#allocation5 + $0x1b8] sm:$0xff]
    %v113 = vld [vmem:[#allocation5 + $0x1c0] sm:$0xff]
    %v114 = vld [vmem:[#allocation5 + $0x1c8] sm:$0xff]
    %v115 = vld [vmem:[#allocation5 + $0x1d0] sm:$0xff]
    %v116 = vld [vmem:[#allocation5 + $0x1d8] sm:$0xf]
    %v117 = vld [vmem:[#allocation5 + $0x1dc] sm:$0xff]
    %v118 = vld [vmem:[#allocation5 + $0x1e4] sm:$0xff]
    %v119 = vld [vmem:[#allocation5 + $0x1ec] sm:$0xff]
    %v120 = vld [vmem:[#allocation5 + $0x1f4] sm:$0xff]
    %v121 = vld [vmem:[#allocation5 + $0x1fc] sm:$0xff]
    %v122 = vld [vmem:[#allocation5 + $0x204] sm:$0xff]
    %v123 = vld [vmem:[#allocation5 + $0x20c] sm:$0xff]
    %v124 = vld [vmem:[#allocation5 + $0x214] sm:$0xff]
    %v125 = vld [vmem:[#allocation5 + $0x21c] sm:$0xf]
    %v126 = vld [vmem:[#allocation5 + $0x220] sm:$0xff]
    %v127 = vld [vmem:[#allocation5 + $0x228] sm:$0xff]
    %v128 = vld [vmem:[#allocation5 + $0x230] sm:$0xff]
    %v129 = vld [vmem:[#allocation5 + $0x238] sm:$0xff]
    %v130 = vld [vmem:[#allocation5 + $0x240] sm:$0xff]
    %v131 = vld [vmem:[#allocation5 + $0x248] sm:$0xff]
    %v132 = vld [vmem:[#allocation5 + $0x250] sm:$0xff]
    %v133 = vld [vmem:[#allocation5 + $0x258] sm:$0xff]
    %v134 = vld [vmem:[#allocation5 + $0x260] sm:$0xf]
    %v135 = vld [vmem:[#allocation5 + $0x264] sm:$0xff]
    %v136 = vld [vmem:[#allocation5 + $0x26c] sm:$0xff]
    %v137 = vld [vmem:[#allocation5 + $0x274] sm:$0xff]
    %v138 = vld [vmem:[#allocation5 + $0x27c] sm:$0xff]
    %v139 = vld [vmem:[#allocation5 + $0x284] sm:$0xff]
    %v140 = vld [vmem:[#allocation5 + $0x28c] sm:$0xff]
    %v141 = vld [vmem:[#allocation5 + $0x294] sm:$0xff]
    %v142 = vld [vmem:[#allocation5 + $0x29c] sm:$0xff]
    %v143 = vld [vmem:[#allocation5 + $0x2a4] sm:$0xf]
    %v144 = vld [vmem:[#allocation5 + $0x2a8] sm:$0x77]
    %v145 = vld [vmem:[#allocation5 + $0x2b0] sm:$0x77]
    %v146 = vld [vmem:[#allocation5 + $0x2b8] sm:$0x77]
    %v147 = vld [vmem:[#allocation5 + $0x2c0] sm:$0x77]
    %v148 = vld [vmem:[#allocation5 + $0x2c8] sm:$0x77]
    %v149 = vld [vmem:[#allocation5 + $0x2d0] sm:$0x77]
    %v150 = vld [vmem:[#allocation5 + $0x2d8] sm:$0x77]
    %v151 = vld [vmem:[#allocation5 + $0x2e0] sm:$0x77]
    %v152 = vld [vmem:[#allocation5 + $0x2e8] sm:$0x7]
    %v153 = vld [vmem:[#allocation7] sm:$0xff]
    %v154 = vld [vmem:[#allocation7 + $0x8] sm:$0xff]
    %v155 = vld [vmem:[#allocation7 + $0x10] sm:$0x1]
    %v255 = vunpack.c.l.b16 %v54
    %v256 = vunpack.c.h.b16 %v54
    %v257 = vunpack.c.l.b16 %v55
    %v258 = vunpack.c.h.b16 %v55
    %v259 = vunpack.c.l.b16 %v56
    %v260 = vunpack.c.h.b16 %v56
    %v261 = vunpack.c.l.b16 %v57
    %v262 = vunpack.c.h.b16 %v57
    %v263 = vunpack.c.l.b16 %v58
    %v264 = vunpack.c.h.b16 %v58
    %v265 = vunpack.c.l.b16 %v59
    %v266 = vunpack.c.h.b16 %v59
    %v267 = vunpack.c.l.b16 %v60
    %v268 = vunpack.c.h.b16 %v60
    %v269 = vunpack.c.l.b16 %v61
    %v270 = vunpack.c.h.b16 %v61
    %v271 = vunpack.c.l.b16 %v62
    %v272 = vunpack.c.l.b16 %v63
    %v273 = vunpack.c.h.b16 %v63
    %v274 = vunpack.c.l.b16 %v64
    %v275 = vunpack.c.h.b16 %v64
    %v276 = vunpack.c.l.b16 %v65
    %v277 = vunpack.c.h.b16 %v65
    %v278 = vunpack.c.l.b16 %v66
    %v279 = vunpack.c.h.b16 %v66
    %v280 = vunpack.c.l.b16 %v67
    %v281 = vunpack.c.h.b16 %v67
    %v282 = vunpack.c.l.b16 %v68
    %v283 = vunpack.c.h.b16 %v68
    %v284 = vunpack.c.l.b16 %v69
    %v285 = vunpack.c.h.b16 %v69
    %v286 = vunpack.c.l.b16 %v70
    %v287 = vunpack.c.h.b16 %v70
    %v288 = vunpack.c.l.b16 %v71
    %v289 = vunpack.c.l.b16 %v72
    %v290 = vunpack.c.h.b16 %v72
    %v291 = vunpack.c.l.b16 %v73
    %v292 = vunpack.c.h.b16 %v73
    %v293 = vunpack.c.l.b16 %v74
    %v294 = vunpack.c.h.b16 %v74
    %v295 = vunpack.c.l.b16 %v75
    %v296 = vunpack.c.h.b16 %v75
    %v297 = vunpack.c.l.b16 %v76
    %v298 = vunpack.c.h.b16 %v76
    %v299 = vunpack.c.l.b16 %v77
    %v300 = vunpack.c.h.b16 %v77
    %v301 = vunpack.c.l.b16 %v78
    %v302 = vunpack.c.h.b16 %v78
    %v303 = vunpack.c.l.b16 %v79
    %v304 = vunpack.c.h.b16 %v79
    %v305 = vunpack.c.l.b16 %v80
    %v306 = vunpack.c.l.b16 %v81
    %v307 = vunpack.c.h.b16 %v81
    %v308 = vunpack.c.l.b16 %v82
    %v309 = vunpack.c.h.b16 %v82
    %v310 = vunpack.c.l.b16 %v83
    %v311 = vunpack.c.h.b16 %v83
    %v312 = vunpack.c.l.b16 %v84
    %v313 = vunpack.c.h.b16 %v84
    %v314 = vunpack.c.l.b16 %v85
    %v315 = vunpack.c.h.b16 %v85
    %v316 = vunpack.c.l.b16 %v86
    %v317 = vunpack.c.h.b16 %v86
    %v318 = vunpack.c.l.b16 %v87
    %v319 = vunpack.c.h.b16 %v87
    %v320 = vunpack.c.l.b16 %v88
    %v321 = vunpack.c.h.b16 %v88
    %v322 = vunpack.c.l.b16 %v89
    %v323 = vunpack.c.l.b16 %v90
    %v324 = vunpack.c.h.b16 %v90
    %v325 = vunpack.c.l.b16 %v91
    %v326 = vunpack.c.h.b16 %v91
    %v327 = vunpack.c.l.b16 %v92
    %v328 = vunpack.c.h.b16 %v92
    %v329 = vunpack.c.l.b16 %v93
    %v330 = vunpack.c.h.b16 %v93
    %v331 = vunpack.c.l.b16 %v94
    %v332 = vunpack.c.h.b16 %v94
    %v333 = vunpack.c.l.b16 %v95
    %v334 = vunpack.c.h.b16 %v95
    %v335 = vunpack.c.l.b16 %v96
    %v336 = vunpack.c.h.b16 %v96
    %v337 = vunpack.c.l.b16 %v97
    %v338 = vunpack.c.h.b16 %v97
    %v339 = vunpack.c.l.b16 %v98
    %v340 = vunpack.c.l.b16 %v99
    %v341 = vunpack.c.h.b16 %v99
    %v342 = vunpack.c.l.b16 %v100
    %v343 = vunpack.c.h.b16 %v100
    %v344 = vunpack.c.l.b16 %v101
    %v345 = vunpack.c.h.b16 %v101
    %v346 = vunpack.c.l.b16 %v102
    %v347 = vunpack.c.h.b16 %v102
    %v348 = vunpack.c.l.b16 %v103
    %v349 = vunpack.c.h.b16 %v103
    %v350 = vunpack.c.l.b16 %v104
    %v351 = vunpack.c.h.b16 %v104
    %v352 = vunpack.c.l.b16 %v105
    %v353 = vunpack.c.h.b16 %v105
    %v354 = vunpack.c.l.b16 %v106
    %v355 = vunpack.c.h.b16 %v106
    %v356 = vunpack.c.l.b16 %v107
    %v357 = vunpack.c.l.b16 %v108
    %v358 = vunpack.c.h.b16 %v108
    %v359 = vunpack.c.l.b16 %v109
    %v360 = vunpack.c.h.b16 %v109
    %v361 = vunpack.c.l.b16 %v110
    %v362 = vunpack.c.h.b16 %v110
    %v363 = vunpack.c.l.b16 %v111
    %v364 = vunpack.c.h.b16 %v111
    %v365 = vunpack.c.l.b16 %v112
    %v366 = vunpack.c.h.b16 %v112
    %v367 = vunpack.c.l.b16 %v113
    %v368 = vunpack.c.h.b16 %v113
    %v369 = vunpack.c.l.b16 %v114
    %v370 = vunpack.c.h.b16 %v114
    %v371 = vunpack.c.l.b16 %v115
    %v372 = vunpack.c.h.b16 %v115
    %v373 = vunpack.c.l.b16 %v116
    %v374 = vunpack.c.l.b16 %v117
    %v375 = vunpack.c.h.b16 %v117
    %v376 = vunpack.c.l.b16 %v118
    %v377 = vunpack.c.h.b16 %v118
    %v378 = vunpack.c.l.b16 %v119
    %v379 = vunpack.c.h.b16 %v119
    %v380 = vunpack.c.l.b16 %v120
    %v381 = vunpack.c.h.b16 %v120
    %v382 = vunpack.c.l.b16 %v121
    %v383 = vunpack.c.h.b16 %v121
    %v384 = vunpack.c.l.b16 %v122
    %v385 = vunpack.c.h.b16 %v122
    %v386 = vunpack.c.l.b16 %v123
    %v387 = vunpack.c.h.b16 %v123
    %v388 = vunpack.c.l.b16 %v124
    %v389 = vunpack.c.h.b16 %v124
    %v390 = vunpack.c.l.b16 %v125
    %v391 = vunpack.c.l.b16 %v126
    %v392 = vunpack.c.h.b16 %v126
    %v393 = vunpack.c.l.b16 %v127
    %v394 = vunpack.c.h.b16 %v127
    %v395 = vunpack.c.l.b16 %v128
    %v396 = vunpack.c.h.b16 %v128
    %v397 = vunpack.c.l.b16 %v129
    %v398 = vunpack.c.h.b16 %v129
    %v399 = vunpack.c.l.b16 %v130
    %v400 = vunpack.c.h.b16 %v130
    %v401 = vunpack.c.l.b16 %v131
    %v402 = vunpack.c.h.b16 %v131
    %v403 = vunpack.c.l.b16 %v132
    %v404 = vunpack.c.h.b16 %v132
    %v405 = vunpack.c.l.b16 %v133
    %v406 = vunpack.c.h.b16 %v133
    %v407 = vunpack.c.l.b16 %v134
    %v408 = vunpack.c.l.b16 %v135
    %v409 = vunpack.c.h.b16 %v135
    %v410 = vunpack.c.l.b16 %v136
    %v411 = vunpack.c.h.b16 %v136
    %v412 = vunpack.c.l.b16 %v137
    %v413 = vunpack.c.h.b16 %v137
    %v414 = vunpack.c.l.b16 %v138
    %v415 = vunpack.c.h.b16 %v138
    %v416 = vunpack.c.l.b16 %v139
    %v417 = vunpack.c.h.b16 %v139
    %v418 = vunpack.c.l.b16 %v140
    %v419 = vunpack.c.h.b16 %v140
    %v420 = vunpack.c.l.b16 %v141
    %v421 = vunpack.c.h.b16 %v141
    %v422 = vunpack.c.l.b16 %v142
    %v423 = vunpack.c.h.b16 %v142
    %v424 = vunpack.c.l.b16 %v143
    %v425 = vunpack.c.l.b16 %v144
    %v426 = vunpack.c.h.b16 %v144
    %v427 = vunpack.c.l.b16 %v145
    %v428 = vunpack.c.h.b16 %v145
    %v429 = vunpack.c.l.b16 %v146
    %v430 = vunpack.c.h.b16 %v146
    %v431 = vunpack.c.l.b16 %v147
    %v432 = vunpack.c.h.b16 %v147
    %v433 = vunpack.c.l.b16 %v148
    %v434 = vunpack.c.h.b16 %v148
    %v435 = vunpack.c.l.b16 %v149
    %v436 = vunpack.c.h.b16 %v149
    %v437 = vunpack.c.l.b16 %v150
    %v438 = vunpack.c.h.b16 %v150
    %v439 = vunpack.c.l.b16 %v151
    %v440 = vunpack.c.h.b16 %v151
    %v441 = vunpack.c.l.b16 %v152
    %v442 = vpack.c.b16 %v272, %v255
    %v443 = vpack.c.b16 %v273, %v256
    %v444 = vpack.c.b16 %v274, %v257
    %v445 = vpack.c.b16 %v275, %v258
    %v446 = vpack.c.b16 %v276, %v259
    %v447 = vpack.c.b16 %v277, %v260
    %v448 = vpack.c.b16 %v278, %v261
    %v449 = vpack.c.b16 %v279, %v262
    %v450 = vpack.c.b16 %v280, %v263
    %v451 = vpack.c.b16 %v281, %v264
    %v452 = vpack.c.b16 %v282, %v265
    %v453 = vpack.c.b16 %v283, %v266
    %v454 = vpack.c.b16 %v284, %v267
    %v455 = vpack.c.b16 %v285, %v268
    %v456 = vpack.c.b16 %v286, %v269
    %v457 = vpack.c.b16 %v287, %v270
    %v458 = vpack.c.b16 %v288, %v271
    %v459 = vpack.c.b16 %v306, %v289
    %v460 = vpack.c.b16 %v307, %v290
    %v461 = vpack.c.b16 %v308, %v291
    %v462 = vpack.c.b16 %v309, %v292
    %v463 = vpack.c.b16 %v310, %v293
    %v464 = vpack.c.b16 %v311, %v294
    %v465 = vpack.c.b16 %v312, %v295
    %v466 = vpack.c.b16 %v313, %v296
    %v467 = vpack.c.b16 %v314, %v297
    %v468 = vpack.c.b16 %v315, %v298
    %v469 = vpack.c.b16 %v316, %v299
    %v470 = vpack.c.b16 %v317, %v300
    %v471 = vpack.c.b16 %v318, %v301
    %v472 = vpack.c.b16 %v319, %v302
    %v473 = vpack.c.b16 %v320, %v303
    %v474 = vpack.c.b16 %v321, %v304
    %v475 = vpack.c.b16 %v322, %v305
    %v476 = vpack.c.b16 %v340, %v323
    %v477 = vpack.c.b16 %v341, %v324
    %v478 = vpack.c.b16 %v342, %v325
    %v479 = vpack.c.b16 %v343, %v326
    %v480 = vpack.c.b16 %v344, %v327
    %v481 = vpack.c.b16 %v345, %v328
    %v482 = vpack.c.b16 %v346, %v329
    %v483 = vpack.c.b16 %v347, %v330
    %v484 = vpack.c.b16 %v348, %v331
    %v485 = vpack.c.b16 %v349, %v332
    %v486 = vpack.c.b16 %v350, %v333
    %v487 = vpack.c.b16 %v351, %v334
    %v488 = vpack.c.b16 %v352, %v335
    %v489 = vpack.c.b16 %v353, %v336
    %v490 = vpack.c.b16 %v354, %v337
    %v491 = vpack.c.b16 %v355, %v338
    %v492 = vpack.c.b16 %v356, %v339
    %v493 = vpack.c.b16 %v374, %v357
    %v494 = vpack.c.b16 %v375, %v358
    %v495 = vpack.c.b16 %v376, %v359
    %v496 = vpack.c.b16 %v377, %v360
    %v497 = vpack.c.b16 %v378, %v361
    %v498 = vpack.c.b16 %v379, %v362
    %v499 = vpack.c.b16 %v380, %v363
    %v500 = vpack.c.b16 %v381, %v364
    %v501 = vpack.c.b16 %v382, %v365
    %v502 = vpack.c.b16 %v383, %v366
    %v503 = vpack.c.b16 %v384, %v367
    %v504 = vpack.c.b16 %v385, %v368
    %v505 = vpack.c.b16 %v386, %v369
    %v506 = vpack.c.b16 %v387, %v370
    %v507 = vpack.c.b16 %v388, %v371
    %v508 = vpack.c.b16 %v389, %v372
    %v509 = vpack.c.b16 %v390, %v373
    %v510 = vpack.c.b16 %v408, %v391
    %v511 = vpack.c.b16 %v409, %v392
    %v512 = vpack.c.b16 %v410, %v393
    %v513 = vpack.c.b16 %v411, %v394
    %v514 = vpack.c.b16 %v412, %v395
    %v515 = vpack.c.b16 %v413, %v396
    %v516 = vpack.c.b16 %v414, %v397
    %v517 = vpack.c.b16 %v415, %v398
    %v518 = vpack.c.b16 %v416, %v399
    %v519 = vpack.c.b16 %v417, %v400
    %v520 = vpack.c.b16 %v418, %v401
    %v521 = vpack.c.b16 %v419, %v402
    %v522 = vpack.c.b16 %v420, %v403
    %v523 = vpack.c.b16 %v421, %v404
    %v524 = vpack.c.b16 %v422, %v405
    %v525 = vpack.c.b16 %v423, %v406
    %v526 = vpack.c.b16 %v424, %v407
    %v527 = vpack.c.b16 %v425, %v425
    %v528 = vpack.c.b16 %v426, %v426
    %v529 = vpack.c.b16 %v427, %v427
    %v530 = vpack.c.b16 %v428, %v428
    %v531 = vpack.c.b16 %v429, %v429
    %v532 = vpack.c.b16 %v430, %v430
    %v533 = vpack.c.b16 %v431, %v431
    %v534 = vpack.c.b16 %v432, %v432
    %v535 = vpack.c.b16 %v433, %v433
    %v536 = vpack.c.b16 %v434, %v434
    %v537 = vpack.c.b16 %v435, %v435
    %v538 = vpack.c.b16 %v436, %v436
    %v539 = vpack.c.b16 %v437, %v437
    %v540 = vpack.c.b16 %v438, %v438
    %v541 = vpack.c.b16 %v439, %v439
    %v542 = vpack.c.b16 %v440, %v440
    %v543 = vpack.c.b16 %v441, %v441
    %v632 = vlaneseq
    %v633 = vshrl.u32 %v632, 7
    %v634 = vsub.s32 0, %v633
    %v635 = vrot.slane %v153, %v634
    %v636 = vlaneseq
    %v637 = vshrl.u32 %v636, 7
    %v638 = vsub.s32 1, %v637
    %v639 = vrot.slane %v153, %v638
    %v640 = vlaneseq
    %v641 = vshrl.u32 %v640, 7
    %v642 = vsub.s32 2, %v641
    %v643 = vrot.slane %v153, %v642
    %v644 = vlaneseq
    %v645 = vshrl.u32 %v644, 7
    %v646 = vsub.s32 3, %v645
    %v647 = vrot.slane %v153, %v646
    %v648 = vlaneseq
    %v649 = vshrl.u32 %v648, 7
    %v650 = vsub.s32 4, %v649
    %v651 = vrot.slane %v153, %v650
    %v652 = vlaneseq
    %v653 = vshrl.u32 %v652, 7
    %v654 = vsub.s32 5, %v653
    %v655 = vrot.slane %v153, %v654
    %v656 = vlaneseq
    %v657 = vshrl.u32 %v656, 7
    %v658 = vsub.s32 6, %v657
    %v659 = vrot.slane %v153, %v658
    %v660 = vlaneseq
    %v661 = vshrl.u32 %v660, 7
    %v662 = vsub.s32 7, %v661
    %v663 = vrot.slane %v153, %v662
    %v664 = vlaneseq
    %v665 = vshrl.u32 %v664, 7
    %v666 = vsub.s32 0, %v665
    %v667 = vrot.slane %v154, %v666
    %v668 = vlaneseq
    %v669 = vshrl.u32 %v668, 7
    %v670 = vsub.s32 1, %v669
    %v671 = vrot.slane %v154, %v670
    %v672 = vlaneseq
    %v673 = vshrl.u32 %v672, 7
    %v674 = vsub.s32 2, %v673
    %v675 = vrot.slane %v154, %v674
    %v676 = vlaneseq
    %v677 = vshrl.u32 %v676, 7
    %v678 = vsub.s32 3, %v677
    %v679 = vrot.slane %v154, %v678
    %v680 = vlaneseq
    %v681 = vshrl.u32 %v680, 7
    %v682 = vsub.s32 4, %v681
    %v683 = vrot.slane %v154, %v682
    %v684 = vlaneseq
    %v685 = vshrl.u32 %v684, 7
    %v686 = vsub.s32 5, %v685
    %v687 = vrot.slane %v154, %v686
    %v688 = vlaneseq
    %v689 = vshrl.u32 %v688, 7
    %v690 = vsub.s32 6, %v689
    %v691 = vrot.slane %v154, %v690
    %v692 = vlaneseq
    %v693 = vshrl.u32 %v692, 7
    %v694 = vsub.s32 7, %v693
    %v695 = vrot.slane %v154, %v694
    %v696 = vlaneseq
    %v697 = vshrl.u32 %v696, 7
    %v698 = vsub.s32 0, %v697
    %v699 = vrot.slane %v155, %v698
    %vm717 = vcmask 703488
    %v719 = vsel %vm717, %v53, 0
    %vm721 = vcmask 1042432
    %v723 = vsel %vm721, %v527, 0
    %v726 = vsel %vm721, %v528, 0
    %v729 = vsel %vm721, %v529, 0
    %v732 = vsel %vm721, %v530, 0
    %v735 = vsel %vm721, %v531, 0
    %v738 = vsel %vm721, %v532, 0
    %v741 = vsel %vm721, %v533, 0
    %v744 = vsel %vm721, %v534, 0
    %v747 = vsel %vm721, %v535, 0
    %v750 = vsel %vm721, %v536, 0
    %v753 = vsel %vm721, %v537, 0
    %v756 = vsel %vm721, %v538, 0
    %v759 = vsel %vm721, %v539, 0
    %v762 = vsel %vm721, %v540, 0
    %v765 = vsel %vm721, %v541, 0
    %v768 = vsel %vm721, %v542, 0
    %v771 = vsel %vm721, %v543, 0
    %773 = vmatprep.subr.bf16.mxu0 %v443
    %774 = vmatpush1.bf16.msra.mxu0 %v442
    %775 = vmatprep.subr.bf16.mxu0 %v460
    %776 = vmatpush1.bf16.msra.mxu0 %v459
    %777 = vmatprep.subr.bf16.mxu0 %v477
    %778 = vmatpush1.bf16.msra.mxu0 %v476
    %779 = vmatprep.subr.bf16.mxu0 %v494
    %780 = vmatpush1.bf16.msra.mxu0 %v493
    %781 = vmatprep.subr.bf16.mxu0 %v511
    %782 = vmatpush1.bf16.msra.mxu0 %v510
    %783 = vmatprep.subr.bf16.mxu0 %v726
    %784 = vmatpush1.bf16.msra.mxu0 %v723
    %785 = vmatprep.subr.bf16.mxu0 0
    %786 = vmatpush1.bf16.msra.mxu0 0
    %787 = vmatprep.subr.bf16.mxu0 0
    %788 = vmatpush1.bf16.msra.mxu0 0
    %789 = vmatprep.subr.bf16.mxu0 0
    %790 = vmatpush1.bf16.msra.mxu0 0
    %791 = vmatprep.subr.bf16.mxu0 0
    %792 = vmatpush1.bf16.msra.mxu0 0
    %793 = vmatprep.subr.bf16.mxu0 0
    %794 = vmatpush1.bf16.msra.mxu0 0
    %795 = vmatprep.subr.bf16.mxu0 0
    %796 = vmatpush1.bf16.msra.mxu0 0
    %797 = vmatprep.subr.bf16.mxu0 0
    %798 = vmatpush1.bf16.msra.mxu0 0
    %799 = vmatprep.subr.bf16.mxu0 0
    %800 = vmatpush1.bf16.msra.mxu0 0
    %801 = vmatprep.subr.bf16.mxu0 0
    %802 = vmatpush1.bf16.msra.mxu0 0
    %803 = vmatprep.subr.bf16.mxu0 0
    %804 = vmatpush1.bf16.msra.mxu0 0
    %805 = vmatprep.mubr.bf16.mxu0 0
    %806 = vmatmul.mubr.bf16.gmra.mrb[0].mxu0 %v719
    %v807 = vpop.f32.mrb[0].mxu0
    %v808 = vadd.f32 %v635, %v807
    %v809 = vpop.f32.mrb[0].mxu0
    %v810 = vadd.f32 %v639, %v809
    %v811 = vpop.f32.mrb[0].mxu0
    %v812 = vpop.f32.mrb[0].mxu0
    %813 = vdwg.mxu0
    %814 = vmatprep.subr.bf16.mxu0 %v445
    %815 = vmatpush1.bf16.msra.mxu0 %v444
    %816 = vmatprep.subr.bf16.mxu0 %v462
    %817 = vmatpush1.bf16.msra.mxu0 %v461
    %818 = vmatprep.subr.bf16.mxu0 %v479
    %819 = vmatpush1.bf16.msra.mxu0 %v478
    %820 = vmatprep.subr.bf16.mxu0 %v496
    %821 = vmatpush1.bf16.msra.mxu0 %v495
    %822 = vmatprep.subr.bf16.mxu0 %v513
    %823 = vmatpush1.bf16.msra.mxu0 %v512
    %824 = vmatprep.subr.bf16.mxu0 %v732
    %825 = vmatpush1.bf16.msra.mxu0 %v729
    %826 = vmatprep.subr.bf16.mxu0 0
    %827 = vmatpush1.bf16.msra.mxu0 0
    %828 = vmatprep.subr.bf16.mxu0 0
    %829 = vmatpush1.bf16.msra.mxu0 0
    %830 = vmatprep.subr.bf16.mxu0 0
    %831 = vmatpush1.bf16.msra.mxu0 0
    %832 = vmatprep.subr.bf16.mxu0 0
    %833 = vmatpush1.bf16.msra.mxu0 0
    %834 = vmatprep.subr.bf16.mxu0 0
    %835 = vmatpush1.bf16.msra.mxu0 0
    %836 = vmatprep.subr.bf16.mxu0 0
    %837 = vmatpush1.bf16.msra.mxu0 0
    %838 = vmatprep.subr.bf16.mxu0 0
    %839 = vmatpush1.bf16.msra.mxu0 0
    %840 = vmatprep.subr.bf16.mxu0 0
    %841 = vmatpush1.bf16.msra.mxu0 0
    %842 = vmatprep.subr.bf16.mxu0 0
    %843 = vmatpush1.bf16.msra.mxu0 0
    %844 = vmatprep.subr.bf16.mxu0 0
    %845 = vmatpush1.bf16.msra.mxu0 0
    %846 = vmatprep.mubr.bf16.mxu0 0
    %847 = vmatmul.mubr.bf16.gmra.mrb[0].mxu0 %v719
    %v848 = vpop.f32.mrb[0].mxu0
    %v849 = vadd.f32 %v643, %v848
    %v850 = vpop.f32.mrb[0].mxu0
    %v851 = vadd.f32 %v647, %v850
    %v852 = vpop.f32.mrb[0].mxu0
    %v853 = vpop.f32.mrb[0].mxu0
    %854 = vdwg.mxu0
    %855 = vmatprep.subr.bf16.mxu0 %v447
    %856 = vmatpush1.bf16.msra.mxu0 %v446
    %857 = vmatprep.subr.bf16.mxu0 %v464
    %858 = vmatpush1.bf16.msra.mxu0 %v463
    %859 = vmatprep.subr.bf16.mxu0 %v481
    %860 = vmatpush1.bf16.msra.mxu0 %v480
    %861 = vmatprep.subr.bf16.mxu0 %v498
    %862 = vmatpush1.bf16.msra.mxu0 %v497
    %863 = vmatprep.subr.bf16.mxu0 %v515
    %864 = vmatpush1.bf16.msra.mxu0 %v514
    %865 = vmatprep.subr.bf16.mxu0 %v738
    %866 = vmatpush1.bf16.msra.mxu0 %v735
    %867 = vmatprep.subr.bf16.mxu0 0
    %868 = vmatpush1.bf16.msra.mxu0 0
    %869 = vmatprep.subr.bf16.mxu0 0
    %870 = vmatpush1.bf16.msra.mxu0 0
    %871 = vmatprep.subr.bf16.mxu0 0
    %872 = vmatpush1.bf16.msra.mxu0 0
    %873 = vmatprep.subr.bf16.mxu0 0
    %874 = vmatpush1.bf16.msra.mxu0 0
    %875 = vmatprep.subr.bf16.mxu0 0
    %876 = vmatpush1.bf16.msra.mxu0 0
    %877 = vmatprep.subr.bf16.mxu0 0
    %878 = vmatpush1.bf16.msra.mxu0 0
    %879 = vmatprep.subr.bf16.mxu0 0
    %880 = vmatpush1.bf16.msra.mxu0 0
    %881 = vmatprep.subr.bf16.mxu0 0
    %882 = vmatpush1.bf16.msra.mxu0 0
    %883 = vmatprep.subr.bf16.mxu0 0
    %884 = vmatpush1.bf16.msra.mxu0 0
    %885 = vmatprep.subr.bf16.mxu0 0
    %886 = vmatpush1.bf16.msra.mxu0 0
    %887 = vmatprep.mubr.bf16.mxu0 0
    %888 = vmatmul.mubr.bf16.gmra.mrb[0].mxu0 %v719
    %v889 = vpop.f32.mrb[0].mxu0
    %v890 = vadd.f32 %v651, %v889
    %v891 = vpop.f32.mrb[0].mxu0
    %v892 = vadd.f32 %v655, %v891
    %v893 = vpop.f32.mrb[0].mxu0
    %v894 = vpop.f32.mrb[0].mxu0
    %895 = vdwg.mxu0
    %896 = vmatprep.subr.bf16.mxu0 %v449
    %897 = vmatpush1.bf16.msra.mxu0 %v448
    %898 = vmatprep.subr.bf16.mxu0 %v466
    %899 = vmatpush1.bf16.msra.mxu0 %v465
    %900 = vmatprep.subr.bf16.mxu0 %v483
    %901 = vmatpush1.bf16.msra.mxu0 %v482
    %902 = vmatprep.subr.bf16.mxu0 %v500
    %903 = vmatpush1.bf16.msra.mxu0 %v499
    %904 = vmatprep.subr.bf16.mxu0 %v517
    %905 = vmatpush1.bf16.msra.mxu0 %v516
    %906 = vmatprep.subr.bf16.mxu0 %v744
    %907 = vmatpush1.bf16.msra.mxu0 %v741
    %908 = vmatprep.subr.bf16.mxu0 0
    %909 = vmatpush1.bf16.msra.mxu0 0
    %910 = vmatprep.subr.bf16.mxu0 0
    %911 = vmatpush1.bf16.msra.mxu0 0
    %912 = vmatprep.subr.bf16.mxu0 0
    %913 = vmatpush1.bf16.msra.mxu0 0
    %914 = vmatprep.subr.bf16.mxu0 0
    %915 = vmatpush1.bf16.msra.mxu0 0
    %916 = vmatprep.subr.bf16.mxu0 0
    %917 = vmatpush1.bf16.msra.mxu0 0
    %918 = vmatprep.subr.bf16.mxu0 0
    %919 = vmatpush1.bf16.msra.mxu0 0
    %920 = vmatprep.subr.bf16.mxu0 0
    %921 = vmatpush1.bf16.msra.mxu0 0
    %922 = vmatprep.subr.bf16.mxu0 0
    %923 = vmatpush1.bf16.msra.mxu0 0
    %924 = vmatprep.subr.bf16.mxu0 0
    %925 = vmatpush1.bf16.msra.mxu0 0
    %926 = vmatprep.subr.bf16.mxu0 0
    %927 = vmatpush1.bf16.msra.mxu0 0
    %928 = vmatprep.mubr.bf16.mxu0 0
    %929 = vmatmul.mubr.bf16.gmra.mrb[0].mxu0 %v719
    %v930 = vpop.f32.mrb[0].mxu0
    %v931 = vadd.f32 %v659, %v930
    %v932 = vpop.f32.mrb[0].mxu0
    %v933 = vadd.f32 %v663, %v932
    %v934 = vpop.f32.mrb[0].mxu0
    %v935 = vpop.f32.mrb[0].mxu0
    %936 = vdwg.mxu0
    %937 = vmatprep.subr.bf16.mxu0 %v451
    %938 = vmatpush1.bf16.msra.mxu0 %v450
    %939 = vmatprep.subr.bf16.mxu0 %v468
    %940 = vmatpush1.bf16.msra.mxu0 %v467
    %941 = vmatprep.subr.bf16.mxu0 %v485
    %942 = vmatpush1.bf16.msra.mxu0 %v484
    %943 = vmatprep.subr.bf16.mxu0 %v502
    %944 = vmatpush1.bf16.msra.mxu0 %v501
    %945 = vmatprep.subr.bf16.mxu0 %v519
    %946 = vmatpush1.bf16.msra.mxu0 %v518
    %947 = vmatprep.subr.bf16.mxu0 %v750
    %948 = vmatpush1.bf16.msra.mxu0 %v747
    %949 = vmatprep.subr.bf16.mxu0 0
    %950 = vmatpush1.bf16.msra.mxu0 0
    %951 = vmatprep.subr.bf16.mxu0 0
    %952 = vmatpush1.bf16.msra.mxu0 0
    %953 = vmatprep.subr.bf16.mxu0 0
    %954 = vmatpush1.bf16.msra.mxu0 0
    %955 = vmatprep.subr.bf16.mxu0 0
    %956 = vmatpush1.bf16.msra.mxu0 0
    %957 = vmatprep.subr.bf16.mxu0 0
    %958 = vmatpush1.bf16.msra.mxu0 0
    %959 = vmatprep.subr.bf16.mxu0 0
    %960 = vmatpush1.bf16.msra.mxu0 0
    %961 = vmatprep.subr.bf16.mxu0 0
    %962 = vmatpush1.bf16.msra.mxu0 0
    %963 = vmatprep.subr.bf16.mxu0 0
    %964 = vmatpush1.bf16.msra.mxu0 0
    %965 = vmatprep.subr.bf16.mxu0 0
    %966 = vmatpush1.bf16.msra.mxu0 0
    %967 = vmatprep.subr.bf16.mxu0 0
    %968 = vmatpush1.bf16.msra.mxu0 0
    %969 = vmatprep.mubr.bf16.mxu0 0
    %970 = vmatmul.mubr.bf16.gmra.mrb[0].mxu0 %v719
    %v971 = vpop.f32.mrb[0].mxu0
    %v972 = vadd.f32 %v667, %v971
    %v973 = vpop.f32.mrb[0].mxu0
    %v974 = vadd.f32 %v671, %v973
    %v975 = vpop.f32.mrb[0].mxu0
    %v976 = vpop.f32.mrb[0].mxu0
    %977 = vdwg.mxu0
    %978 = vmatprep.subr.bf16.mxu0 %v453
    %979 = vmatpush1.bf16.msra.mxu0 %v452
    %980 = vmatprep.subr.bf16.mxu0 %v470
    %981 = vmatpush1.bf16.msra.mxu0 %v469
    %982 = vmatprep.subr.bf16.mxu0 %v487
    %983 = vmatpush1.bf16.msra.mxu0 %v486
    %984 = vmatprep.subr.bf16.mxu0 %v504
    %985 = vmatpush1.bf16.msra.mxu0 %v503
    %986 = vmatprep.subr.bf16.mxu0 %v521
    %987 = vmatpush1.bf16.msra.mxu0 %v520
    %988 = vmatprep.subr.bf16.mxu0 %v756
    %989 = vmatpush1.bf16.msra.mxu0 %v753
    %990 = vmatprep.subr.bf16.mxu0 0
    %991 = vmatpush1.bf16.msra.mxu0 0
    %992 = vmatprep.subr.bf16.mxu0 0
    %993 = vmatpush1.bf16.msra.mxu0 0
    %994 = vmatprep.subr.bf16.mxu0 0
    %995 = vmatpush1.bf16.msra.mxu0 0
    %996 = vmatprep.subr.bf16.mxu0 0
    %997 = vmatpush1.bf16.msra.mxu0 0
    %998 = vmatprep.subr.bf16.mxu0 0
    %999 = vmatpush1.bf16.msra.mxu0 0
    %1000 = vmatprep.subr.bf16.mxu0 0
    %1001 = vmatpush1.bf16.msra.mxu0 0
    %1002 = vmatprep.subr.bf16.mxu0 0
    %1003 = vmatpush1.bf16.msra.mxu0 0
    %1004 = vmatprep.subr.bf16.mxu0 0
    %1005 = vmatpush1.bf16.msra.mxu0 0
    %1006 = vmatprep.subr.bf16.mxu0 0
    %1007 = vmatpush1.bf16.msra.mxu0 0
    %1008 = vmatprep.subr.bf16.mxu0 0
    %1009 = vmatpush1.bf16.msra.mxu0 0
    %1010 = vmatprep.mubr.bf16.mxu0 0
    %1011 = vmatmul.mubr.bf16.gmra.mrb[0].mxu0 %v719
    %v1012 = vpop.f32.mrb[0].mxu0
    %v1013 = vadd.f32 %v675, %v1012
    %v1014 = vpop.f32.mrb[0].mxu0
    %v1015 = vadd.f32 %v679, %v1014
    %v1016 = vpop.f32.mrb[0].mxu0
    %v1017 = vpop.f32.mrb[0].mxu0
    %1018 = vdwg.mxu0
    %1019 = vmatprep.subr.bf16.mxu0 %v455
    %1020 = vmatpush1.bf16.msra.mxu0 %v454
    %1021 = vmatprep.subr.bf16.mxu0 %v472
    %1022 = vmatpush1.bf16.msra.mxu0 %v471
    %1023 = vmatprep.subr.bf16.mxu0 %v489
    %1024 = vmatpush1.bf16.msra.mxu0 %v488
    %1025 = vmatprep.subr.bf16.mxu0 %v506
    %1026 = vmatpush1.bf16.msra.mxu0 %v505
    %1027 = vmatprep.subr.bf16.mxu0 %v523
    %1028 = vmatpush1.bf16.msra.mxu0 %v522
    %1029 = vmatprep.subr.bf16.mxu0 %v762
    %1030 = vmatpush1.bf16.msra.mxu0 %v759
    %1031 = vmatprep.subr.bf16.mxu0 0
    %1032 = vmatpush1.bf16.msra.mxu0 0
    %1033 = vmatprep.subr.bf16.mxu0 0
    %1034 = vmatpush1.bf16.msra.mxu0 0
    %1035 = vmatprep.subr.bf16.mxu0 0
    %1036 = vmatpush1.bf16.msra.mxu0 0
    %1037 = vmatprep.subr.bf16.mxu0 0
    %1038 = vmatpush1.bf16.msra.mxu0 0
    %1039 = vmatprep.subr.bf16.mxu0 0
    %1040 = vmatpush1.bf16.msra.mxu0 0
    %1041 = vmatprep.subr.bf16.mxu0 0
    %1042 = vmatpush1.bf16.msra.mxu0 0
    %1043 = vmatprep.subr.bf16.mxu0 0
    %1044 = vmatpush1.bf16.msra.mxu0 0
    %1045 = vmatprep.subr.bf16.mxu0 0
    %1046 = vmatpush1.bf16.msra.mxu0 0
    %1047 = vmatprep.subr.bf16.mxu0 0
    %1048 = vmatpush1.bf16.msra.mxu0 0
    %1049 = vmatprep.subr.bf16.mxu0 0
    %1050 = vmatpush1.bf16.msra.mxu0 0
    %1051 = vmatprep.mubr.bf16.mxu0 0
    %1052 = vmatmul.mubr.bf16.gmra.mrb[0].mxu0 %v719
    %v1053 = vpop.f32.mrb[0].mxu0
    %v1054 = vadd.f32 %v683, %v1053
    %v1055 = vpop.f32.mrb[0].mxu0
    %v1056 = vadd.f32 %v687, %v1055
    %v1057 = vpop.f32.mrb[0].mxu0
    %v1058 = vpop.f32.mrb[0].mxu0
    %1059 = vdwg.mxu0
    %1060 = vmatprep.subr.bf16.mxu0 %v457
    %1061 = vmatpush1.bf16.msra.mxu0 %v456
    %1062 = vmatprep.subr.bf16.mxu0 %v474
    %1063 = vmatpush1.bf16.msra.mxu0 %v473
    %1064 = vmatprep.subr.bf16.mxu0 %v491
    %1065 = vmatpush1.bf16.msra.mxu0 %v490
    %1066 = vmatprep.subr.bf16.mxu0 %v508
    %1067 = vmatpush1.bf16.msra.mxu0 %v507
    %1068 = vmatprep.subr.bf16.mxu0 %v525
    %1069 = vmatpush1.bf16.msra.mxu0 %v524
    %1070 = vmatprep.subr.bf16.mxu0 %v768
    %1071 = vmatpush1.bf16.msra.mxu0 %v765
    %1072 = vmatprep.subr.bf16.mxu0 0
    %1073 = vmatpush1.bf16.msra.mxu0 0
    %1074 = vmatprep.subr.bf16.mxu0 0
    %1075 = vmatpush1.bf16.msra.mxu0 0
    %1076 = vmatprep.subr.bf16.mxu0 0
    %1077 = vmatpush1.bf16.msra.mxu0 0
    %1078 = vmatprep.subr.bf16.mxu0 0
    %1079 = vmatpush1.bf16.msra.mxu0 0
    %1080 = vmatprep.subr.bf16.mxu0 0
    %1081 = vmatpush1.bf16.msra.mxu0 0
    %1082 = vmatprep.subr.bf16.mxu0 0
    %1083 = vmatpush1.bf16.msra.mxu0 0
    %1084 = vmatprep.subr.bf16.mxu0 0
    %1085 = vmatpush1.bf16.msra.mxu0 0
    %1086 = vmatprep.subr.bf16.mxu0 0
    %1087 = vmatpush1.bf16.msra.mxu0 0
    %1088 = vmatprep.subr.bf16.mxu0 0
    %1089 = vmatpush1.bf16.msra.mxu0 0
    %1090 = vmatprep.subr.bf16.mxu0 0
    %1091 = vmatpush1.bf16.msra.mxu0 0
    %1092 = vmatprep.mubr.bf16.mxu0 0
    %1093 = vmatmul.mubr.bf16.gmra.mrb[0].mxu0 %v719
    %v1094 = vpop.f32.mrb[0].mxu0
    %v1095 = vadd.f32 %v691, %v1094
    %v1096 = vpop.f32.mrb[0].mxu0
    %v1097 = vadd.f32 %v695, %v1096
    %v1098 = vpop.f32.mrb[0].mxu0
    %v1099 = vpop.f32.mrb[0].mxu0
    %1100 = vdwg.mxu0
    %1101 = vmatprep.subr.bf16.mxu0 0
    %1102 = vmatpush1.bf16.msra.mxu0 %v458
    %1103 = vmatprep.subr.bf16.mxu0 0
    %1104 = vmatpush1.bf16.msra.mxu0 %v475
    %1105 = vmatprep.subr.bf16.mxu0 0
    %1106 = vmatpush1.bf16.msra.mxu0 %v492
    %1107 = vmatprep.subr.bf16.mxu0 0
    %1108 = vmatpush1.bf16.msra.mxu0 %v509
    %1109 = vmatprep.subr.bf16.mxu0 0
    %1110 = vmatpush1.bf16.msra.mxu0 %v526
    %1111 = vmatprep.subr.bf16.mxu0 0
    %1112 = vmatpush1.bf16.msra.mxu0 %v771
    %1113 = vmatprep.subr.bf16.mxu0 0
    %1114 = vmatpush1.bf16.msra.mxu0 0
    %1115 = vmatprep.subr.bf16.mxu0 0
    %1116 = vmatpush1.bf16.msra.mxu0 0
    %1117 = vmatprep.subr.bf16.mxu0 0
    %1118 = vmatpush1.bf16.msra.mxu0 0
    %1119 = vmatprep.subr.bf16.mxu0 0
    %1120 = vmatpush1.bf16.msra.mxu0 0
    %1121 = vmatprep.subr.bf16.mxu0 0
    %1122 = vmatpush1.bf16.msra.mxu0 0
    %1123 = vmatprep.subr.bf16.mxu0 0
    %1124 = vmatpush1.bf16.msra.mxu0 0
    %1125 = vmatprep.subr.bf16.mxu0 0
    %1126 = vmatpush1.bf16.msra.mxu0 0
    %1127 = vmatprep.subr.bf16.mxu0 0
    %1128 = vmatpush1.bf16.msra.mxu0 0
    %1129 = vmatprep.subr.bf16.mxu0 0
    %1130 = vmatpush1.bf16.msra.mxu0 0
    %1131 = vmatprep.subr.bf16.mxu0 0
    %1132 = vmatpush1.bf16.msra.mxu0 0
    %1133 = vmatprep.mubr.bf16.mxu0 0
    %1134 = vmatmul.mubr.bf16.gmra.mrb[0].mxu0 %v719
    %v1135 = vpop.f32.mrb[0].mxu0
    %v1136 = vadd.f32 %v699, %v1135
    %v1137 = vpop.f32.mrb[0].mxu0
    %v1138 = vpop.f32.mrb[0].mxu0
    %v1139 = vpop.f32.mrb[0].mxu0
    %1140 = vdwg.mxu0
    %v1158 = vcombine.low %v808, %v810
    %v1159 = vcombine.low %v849, %v851
    %v1160 = vcombine.low %v890, %v892
    %v1161 = vcombine.low %v931, %v933
    %v1163 = vunpack.c.l.s4 1966171168
    %v1164 = vunpack.c.0.s8 %v1163
    %v1165 = vlaneseq
    %v1166 = vshrl.u32 %v1165, 7
    %v1167 = vsub.s32 %v1164, %v1166
    %v1168 = vrot.slane %v1158, %v1167
    %v1170 = vunpack.c.l.s4 1966171168
    %v1171 = vunpack.c.0.s8 %v1170
    %v1172 = vlaneseq
    %v1173 = vshrl.u32 %v1172, 7
    %v1174 = vsub.s32 %v1171, %v1173
    %v1175 = vrot.slane %v1159, %v1174
    %v1177 = vunpack.c.l.s4 1966171168
    %v1178 = vunpack.c.0.s8 %v1177
    %v1179 = vlaneseq
    %v1180 = vshrl.u32 %v1179, 7
    %v1181 = vsub.s32 %v1178, %v1180
    %v1182 = vrot.slane %v1160, %v1181
    %v1184 = vunpack.c.l.s4 1966171168
    %v1185 = vunpack.c.0.s8 %v1184
    %v1186 = vlaneseq
    %v1187 = vshrl.u32 %v1186, 7
    %v1188 = vsub.s32 %v1185, %v1187
    %v1189 = vrot.slane %v1161, %v1188
    %v1190 = vcombine.low %v1168, %v1175
    %v1191 = vcombine.low %v1182, %v1189
    %v1193 = vunpack.c.l.s4 1966171168
    %v1194 = vunpack.c.0.s8 %v1193
    %v1195 = vlaneseq
    %v1196 = vshrl.u32 %v1195, 7
    %v1197 = vsub.s32 %v1194, %v1196
    %v1198 = vrot.slane %v1190, %v1197
    %v1200 = vunpack.c.l.s4 1966171168
    %v1201 = vunpack.c.0.s8 %v1200
    %v1202 = vlaneseq
    %v1203 = vshrl.u32 %v1202, 7
    %v1204 = vsub.s32 %v1201, %v1203
    %v1205 = vrot.slane %v1191, %v1204
    %v1206 = vcombine.low %v1198, %v1205
    %v1207 = vcombine.low %v972, %v974
    %v1208 = vcombine.low %v1013, %v1015
    %v1209 = vcombine.low %v1054, %v1056
    %v1210 = vcombine.low %v1095, %v1097
    %v1212 = vunpack.c.l.s4 1966171168
    %v1213 = vunpack.c.0.s8 %v1212
    %v1214 = vlaneseq
    %v1215 = vshrl.u32 %v1214, 7
    %v1216 = vsub.s32 %v1213, %v1215
    %v1217 = vrot.slane %v1207, %v1216
    %v1219 = vunpack.c.l.s4 1966171168
    %v1220 = vunpack.c.0.s8 %v1219
    %v1221 = vlaneseq
    %v1222 = vshrl.u32 %v1221, 7
    %v1223 = vsub.s32 %v1220, %v1222
    %v1224 = vrot.slane %v1208, %v1223
    %v1226 = vunpack.c.l.s4 1966171168
    %v1227 = vunpack.c.0.s8 %v1226
    %v1228 = vlaneseq
    %v1229 = vshrl.u32 %v1228, 7
    %v1230 = vsub.s32 %v1227, %v1229
    %v1231 = vrot.slane %v1209, %v1230
    %v1233 = vunpack.c.l.s4 1966171168
    %v1234 = vunpack.c.0.s8 %v1233
    %v1235 = vlaneseq
    %v1236 = vshrl.u32 %v1235, 7
    %v1237 = vsub.s32 %v1234, %v1236
    %v1238 = vrot.slane %v1210, %v1237
    %v1239 = vcombine.low %v1217, %v1224
    %v1240 = vcombine.low %v1231, %v1238
    %v1242 = vunpack.c.l.s4 1966171168
    %v1243 = vunpack.c.0.s8 %v1242
    %v1244 = vlaneseq
    %v1245 = vshrl.u32 %v1244, 7
    %v1246 = vsub.s32 %v1243, %v1245
    %v1247 = vrot.slane %v1239, %v1246
    %v1249 = vunpack.c.l.s4 1966171168
    %v1250 = vunpack.c.0.s8 %v1249
    %v1251 = vlaneseq
    %v1252 = vshrl.u32 %v1251, 7
    %v1253 = vsub.s32 %v1250, %v1252
    %v1254 = vrot.slane %v1240, %v1253
    %v1255 = vcombine.low %v1247, %v1254
    %v1257 = vunpack.c.l.s4 1966171168
    %v1258 = vunpack.c.0.s8 %v1257
    %v1259 = vlaneseq
    %v1260 = vshrl.u32 %v1259, 7
    %v1261 = vsub.s32 %v1258, %v1260
    %v1262 = vrot.slane %v1136, %v1261
    %v1264 = vunpack.c.l.s4 1966171168
    %v1265 = vunpack.c.0.s8 %v1264
    %v1266 = vlaneseq
    %v1267 = vshrl.u32 %v1266, 7
    %v1268 = vsub.s32 %v1265, %v1267
    %v1269 = vrot.slane %v1262, %v1268
    %1273 = vst [vmem:[#allocation8] sm:$0xff] %v1206
    %1274 = vst [vmem:[#allocation8 + $0x8] sm:$0xff] %v1255
    %v1275 = vlaneseq
    %vm1276 = vcmp.ge.s32.totalorder %v1275, 0
    %vm1277 = vcmp.lt.s32.totalorder %v1275, 128
    %vm1278 = vmand %vm1276, %vm1277
    %1279 = vst.msk [vmem:[#allocation8 + $0x10] sm:$0x1] %vm1278, %v1269
    // Predicated region
    $region26: #{tpu_custom_call.1} parent=1 // pred_check
      _
    $region27: #{tpu_custom_call.1} parent=1 // pred_check_branch
      %1281 = sbr.rel (0) target = $region29
    $region28: #{tpu_custom_call.1} parent=1 // pred_region
      %s1283 = ssub.s32 272, 272
      %1284 = vsyncadd [#allocation4], %s1283
      %s1286 = sshll.u32 [#allocation8], 4
      %s1287 = int_to_ptr.vmem [resolvable:$true] %s1286
      %1289 = dma.vmem_to_hbm [thread:$0]  %s1287, 272, %s3, [#allocation4]
    $region29: #{tpu_custom_call.1} parent=1 // pred_fallthru
      _
    // Predicated region
    $region30: #{tpu_custom_call.1} parent=1 // pred_check
      _
    $region31: #{tpu_custom_call.1} parent=1 // pred_check_branch
      %1291 = sbr.rel (0) target = $region33
    $region32: #{tpu_custom_call.1} parent=1 // pred_region
      %1292 = dma.done [#allocation4], 272
    $region33: #{tpu_custom_call.1} parent=1 // pred_fallthru
      _
    %1293 = vsyncpa [#allocation3], 1
    %1294 = vsyncpa [#allocation6], 1
    %1295 = vsyncpa [#allocation4], 1

</llo_original>
